<compile_context>
chip_gen: v7x
topology: tpu7x:2x2x1
jax: 0.10.0
libtpu: 0.0.40
codegen_flags: <defaults>
</compile_context>

<pallas_src>
import jax
import jax.numpy as jnp
from jax.experimental import pallas as pl
from jax.experimental.pallas import tpu as pltpu

LANE = 128                     # TPU lane width (last-dim tiling quantum)
SUBLANE = 8                    # TPU sublane quantum (f32)
TARGET_TILE_BYTES = 1 << 20    # aim for >= 1 MiB of streamed weight per buffer
MAX_TILE_BYTES = 8 << 20       # per-buffer cap so 2 bufs + bias + output fit VMEM


def _choose_tile_v(e, v128):
    """Vocab tile: multiple of 128, sized from a VMEM byte budget."""
    bytes_per_col = max(e, 1) * 2                       # bf16 column of an (E, TILE_V) tile
    want = TARGET_TILE_BYTES // bytes_per_col
    cap = max(LANE, MAX_TILE_BYTES // bytes_per_col)
    tile_v = max(LANE, (min(want, cap) // LANE) * LANE)
    return min(tile_v, v128)


def _vmem_limit_bytes():
    """~75% of physical VMEM (96 MiB on v5e/v6e, 48 MiB on v7x), safe fallback."""
    try:
        cap = int(pltpu.get_tpu_info().vmem_capacity_bytes)
    except Exception:
        cap = 64 * 1024 * 1024
    return min(cap * 3 // 4, 96 * 1024 * 1024)


def gather_mean_kernel(ctx_ref, table_ref, out_ref):
    """One-shot embedding gather + AvgPool1d(window) -> (B_pad, E) f32."""
    # ctx_ref:   (B, W)      int32  SMEM  (scalar-prefetched token ids)
    # table_ref: (V, E)      f32    VMEM  (embedding table)
    # out_ref:   (B_pad, E)  f32    VMEM  (pooled context embedding, zero-padded rows)
    B, W = ctx_ref.shape
    V, E = table_ref.shape
    B_pad = out_ref.shape[0]
    inv_w = jnp.float32(1.0 / W)

    # Accumulate in vregs, single full-block store (no scratch round-trip).
    # TODO(synk): for large B / realistic vocab, gather rows via DMA from an HBM
    # table (memory_space=pl.ANY) instead of a VMEM-resident table + Python loop.
    rows = []
    for bi in range(B):
        acc = jnp.zeros((1, E), jnp.float32)
        for wi in range(W):
            idx = jnp.clip(ctx_ref[bi, wi], 0, V - 1)   # guard against OOB VMEM reads
            acc = acc + table_ref[pl.ds(idx, 1), :]
        rows.append(acc * inv_w)
    for _ in range(B_pad - B):
        rows.append(jnp.zeros((1, E), jnp.float32))
    out_ref[...] = jnp.concatenate(rows, axis=0)


def projection_kernel(x_ref, w_ref, b_ref, out_ref):
    """Streamed GEMM tile: logits[:, jV] = x @ W_t[:, jV] + b[jV]."""
    # x_ref:   (B_pad, E)       f32   resident (same block every step)
    # w_ref:   (E, TILE_V)      bf16  streamed, pre-transposed weight tile
    # b_ref:   (1, TILE_V)      f32   bias tile
    # out_ref: (B_pad, TILE_V)  f32   logits tile (lane-dense, unmasked store)
    out_ref[...] = jnp.dot(x_ref[...].astype(jnp.bfloat16), w_ref[...],
                           preferred_element_type=jnp.float32) + b_ref[...]


def prepare_cbow_params(emb_table, proj_w, proj_b):
    """One-time parameter prep (pad / transpose / cast) — NOT per forward."""
    v, e = emb_table.shape
    v128 = pl.cdiv(v, LANE) * LANE
    tile_v = _choose_tile_v(e, v128)
    n_tiles = pl.cdiv(v128, tile_v)
    if n_tiles > 1 and n_tiles % 2:
        n_tiles += 1                      # even tile count -> even megacore split (v7x)
    v_pad = n_tiles * tile_v

    w_t = jnp.pad(proj_w, ((0, v_pad - v), (0, 0))).T.astype(jnp.bfloat16)   # (E, V_pad)
    b_p = jnp.pad(proj_b, (0, v_pad - v)).reshape(1, v_pad).astype(jnp.float32)
    return {
        "table": emb_table.astype(jnp.float32),   # (V, E) f32
        "w_t": w_t,                               # (E, V_pad) bf16
        "b_p": b_p,                               # (1, V_pad) f32
        "v": v, "e": e, "v_pad": v_pad, "tile_v": tile_v, "n_tiles": n_tiles,
    }


def cbow_forward(context, params):
    """context: [B, W] int; returns logits [B, V] (or [V] if B == 1, like .squeeze())."""
    b, w = context.shape
    v, e = params["v"], params["e"]
    v_pad, tile_v, n_tiles = params["v_pad"], params["tile_v"], params["n_tiles"]
    b_pad = pl.cdiv(b, SUBLANE) * SUBLANE
    vmem_limit = _vmem_limit_bytes()

    ctx = context.astype(jnp.int32)

    # Stage 1: one-shot gather + mean-pool (runs once, off the GEMM critical path).
    pooled = pl.pallas_call(
        gather_mean_kernel,
        out_shape=jax.ShapeDtypeStruct((b_pad, e), jnp.float32),
        grid_spec=pltpu.PrefetchScalarGridSpec(
            num_scalar_prefetch=1,                                     # ctx -> SMEM
            grid=(1,),
            in_specs=[pl.BlockSpec((v, e), lambda i, ctx_ref: (0, 0))],
            out_specs=pl.BlockSpec((b_pad, e), lambda i, ctx_ref: (0, 0)),
        ),
        compiler_params=pltpu.CompilerParams(vmem_limit_bytes=vmem_limit),
    )(ctx, params["table"])

    # Stage 2: vocab-tiled, lane-dense streamed GEMM (HBM-bandwidth bound).
    cost = pl.CostEstimate(
        flops=2 * b_pad * e * v_pad,
        transcendentals=0,
        bytes_accessed=(e * v_pad * 2) + (v_pad * 4)
                       + (b_pad * e * 4) + (b_pad * v_pad * 4),
    )
    logits = pl.pallas_call(
        projection_kernel,
        out_shape=jax.ShapeDtypeStruct((b_pad, v_pad), jnp.float32),
        grid_spec=pltpu.PrefetchScalarGridSpec(
            num_scalar_prefetch=0,
            grid=(n_tiles,),
            in_specs=[
                pl.BlockSpec((b_pad, e), lambda j: (0, 0)),       # pooled x: resident
                pl.BlockSpec((e, tile_v), lambda j: (0, j)),      # weight tile: streamed
                pl.BlockSpec((1, tile_v), lambda j: (0, j)),      # bias tile
            ],
            out_specs=pl.BlockSpec((b_pad, tile_v), lambda j: (0, j)),
        ),
        compiler_params=pltpu.CompilerParams(
            dimension_semantics=("parallel",),                    # vocab tiles -> both TCs
            vmem_limit_bytes=vmem_limit),
        cost_estimate=cost,
    )(pooled, params["w_t"], params["b_p"])

    out = logits[:b, :v]
    # Mimic torch's .squeeze(): with B == 1 the reference returns a rank-1 [V].
    # TODO(synk): torch .squeeze() would also drop V==1/E==1 dims; only B==1 is handled.
    return out[0] if b == 1 else out


if __name__ == "__main__":
    vocab_size = 8
    embedding_size = 4
    window_length = 4
    batch = 2

    key = jax.random.PRNGKey(0)
    k_emb, k_w, k_b = jax.random.split(key, 3)

    # Deterministic parameter init (shapes from the module's __init__).
    emb_table = jax.random.normal(k_emb, (vocab_size, embedding_size), jnp.float32)
    proj_w = jax.random.normal(k_w, (vocab_size, embedding_size), jnp.float32) * 0.5
    proj_b = jax.random.normal(k_b, (vocab_size,), jnp.float32) * 0.1

    params = prepare_cbow_params(emb_table, proj_w, proj_b)   # one-time prep

    context = jnp.array([[1, 2, 4, 5],
                         [0, 3, 6, 7]], dtype=jnp.int32)      # [B, W]

    pred = cbow_forward(context, params)
    jax.block_until_ready(pred)

    assert pred.shape == (batch, vocab_size)
    assert pred.dtype == jnp.float32

    # fp32 reference (Embedding -> mean pool -> Linear). The kernel streams bf16
    # weights, so compare with a tolerance consistent with bf16 rounding.
    ref_emb = emb_table[context].mean(axis=1)                 # [B, E]
    ref = ref_emb @ proj_w.T + proj_b                         # [B, V]
    assert jnp.allclose(pred, ref, atol=5e-2, rtol=5e-2)

    # Original-spec case: batch of one -> rank-1 output like torch .squeeze().
    context1 = jnp.array([[1, 2, 4, 5]], dtype=jnp.int32)
    pred1 = cbow_forward(context1, params)
    jax.block_until_ready(pred1)
    assert pred1.shape == (vocab_size,)
    ref1 = emb_table[context1].mean(axis=1)[0] @ proj_w.T + proj_b
    assert jnp.allclose(pred1, ref1, atol=5e-2, rtol=5e-2)

    print("KERNEL_OK")
</pallas_src>

<mosaic_0001>
module attributes {stable_mosaic.version = 11 : i64} {
  func.func @gather_mean_kernel(%arg0: i32, %arg1: memref<2x4xi32, #tpu.memory_space<smem>>, %arg2: memref<8x4xf32, #tpu.memory_space<vmem>>, %arg3: memref<8x4xf32, #tpu.memory_space<vmem>>) attributes {dimension_semantics = [#tpu.dimension_semantics<arbitrary>], iteration_bounds = array<i64: 1>, scalar_prefetch = 1 : i64, scratch_operands = 0 : i64, tpu.core_type = #tpu.core_type<tc>, window_params = [{pipeline_mode = #tpu.pipeline_mode<synchronous>, transform_indices = @transform_0, window_bounds = array<i64: 8, 4>}, {pipeline_mode = #tpu.pipeline_mode<synchronous>, transform_indices = @transform_1, window_bounds = array<i64: 8, 4>}]} {
    %cst = arith.constant 0.000000e+00 : f32
    %0 = vector.broadcast %cst : f32 to vector<1x4xf32>
    %c0 = arith.constant 0 : index
    %c0_0 = arith.constant 0 : index
    %1 = memref.load %arg1[%c0, %c0_0] : memref<2x4xi32, #tpu.memory_space<smem>>
    %c0_i32 = arith.constant 0 : i32
    %c7_i32 = arith.constant 7 : i32
    %2 = arith.maxsi %c0_i32, %1 : i32
    %3 = arith.minsi %c7_i32, %2 : i32
    %4 = arith.index_cast %3 : i32 to index
    %c0_1 = arith.constant 0 : index
    %5 = vector.load %arg2[%4, %c0_1] : memref<8x4xf32, #tpu.memory_space<vmem>>, vector<1x4xf32>
    %6 = arith.addf %0, %5 : vector<1x4xf32>
    %c0_2 = arith.constant 0 : index
    %c1 = arith.constant 1 : index
    %7 = memref.load %arg1[%c0_2, %c1] : memref<2x4xi32, #tpu.memory_space<smem>>
    %c0_i32_3 = arith.constant 0 : i32
    %c7_i32_4 = arith.constant 7 : i32
    %8 = arith.maxsi %c0_i32_3, %7 : i32
    %9 = arith.minsi %c7_i32_4, %8 : i32
    %10 = arith.index_cast %9 : i32 to index
    %c0_5 = arith.constant 0 : index
    %11 = vector.load %arg2[%10, %c0_5] : memref<8x4xf32, #tpu.memory_space<vmem>>, vector<1x4xf32>
    %12 = arith.addf %6, %11 : vector<1x4xf32>
    %c0_6 = arith.constant 0 : index
    %c2 = arith.constant 2 : index
    %13 = memref.load %arg1[%c0_6, %c2] : memref<2x4xi32, #tpu.memory_space<smem>>
    %c0_i32_7 = arith.constant 0 : i32
    %c7_i32_8 = arith.constant 7 : i32
    %14 = arith.maxsi %c0_i32_7, %13 : i32
    %15 = arith.minsi %c7_i32_8, %14 : i32
    %16 = arith.index_cast %15 : i32 to index
    %c0_9 = arith.constant 0 : index
    %17 = vector.load %arg2[%16, %c0_9] : memref<8x4xf32, #tpu.memory_space<vmem>>, vector<1x4xf32>
    %18 = arith.addf %12, %17 : vector<1x4xf32>
    %c0_10 = arith.constant 0 : index
    %c3 = arith.constant 3 : index
    %19 = memref.load %arg1[%c0_10, %c3] : memref<2x4xi32, #tpu.memory_space<smem>>
    %c0_i32_11 = arith.constant 0 : i32
    %c7_i32_12 = arith.constant 7 : i32
    %20 = arith.maxsi %c0_i32_11, %19 : i32
    %21 = arith.minsi %c7_i32_12, %20 : i32
    %22 = arith.index_cast %21 : i32 to index
    %c0_13 = arith.constant 0 : index
    %23 = vector.load %arg2[%22, %c0_13] : memref<8x4xf32, #tpu.memory_space<vmem>>, vector<1x4xf32>
    %24 = arith.addf %18, %23 : vector<1x4xf32>
    %cst_14 = arith.constant 2.500000e-01 : f32
    %25 = vector.broadcast %cst_14 : f32 to vector<1x4xf32>
    %26 = arith.mulf %24, %25 : vector<1x4xf32>
    %cst_15 = arith.constant 0.000000e+00 : f32
    %27 = vector.broadcast %cst_15 : f32 to vector<1x4xf32>
    %c1_16 = arith.constant 1 : index
    %c0_17 = arith.constant 0 : index
    %28 = memref.load %arg1[%c1_16, %c0_17] : memref<2x4xi32, #tpu.memory_space<smem>>
    %c0_i32_18 = arith.constant 0 : i32
    %c7_i32_19 = arith.constant 7 : i32
    %29 = arith.maxsi %c0_i32_18, %28 : i32
    %30 = arith.minsi %c7_i32_19, %29 : i32
    %31 = arith.index_cast %30 : i32 to index
    %c0_20 = arith.constant 0 : index
    %32 = vector.load %arg2[%31, %c0_20] : memref<8x4xf32, #tpu.memory_space<vmem>>, vector<1x4xf32>
    %33 = arith.addf %27, %32 : vector<1x4xf32>
    %c1_21 = arith.constant 1 : index
    %c1_22 = arith.constant 1 : index
    %34 = memref.load %arg1[%c1_21, %c1_22] : memref<2x4xi32, #tpu.memory_space<smem>>
    %c0_i32_23 = arith.constant 0 : i32
    %c7_i32_24 = arith.constant 7 : i32
    %35 = arith.maxsi %c0_i32_23, %34 : i32
    %36 = arith.minsi %c7_i32_24, %35 : i32
    %37 = arith.index_cast %36 : i32 to index
    %c0_25 = arith.constant 0 : index
    %38 = vector.load %arg2[%37, %c0_25] : memref<8x4xf32, #tpu.memory_space<vmem>>, vector<1x4xf32>
    %39 = arith.addf %33, %38 : vector<1x4xf32>
    %c1_26 = arith.constant 1 : index
    %c2_27 = arith.constant 2 : index
    %40 = memref.load %arg1[%c1_26, %c2_27] : memref<2x4xi32, #tpu.memory_space<smem>>
    %c0_i32_28 = arith.constant 0 : i32
    %c7_i32_29 = arith.constant 7 : i32
    %41 = arith.maxsi %c0_i32_28, %40 : i32
    %42 = arith.minsi %c7_i32_29, %41 : i32
    %43 = arith.index_cast %42 : i32 to index
    %c0_30 = arith.constant 0 : index
    %44 = vector.load %arg2[%43, %c0_30] : memref<8x4xf32, #tpu.memory_space<vmem>>, vector<1x4xf32>
    %45 = arith.addf %39, %44 : vector<1x4xf32>
    %c1_31 = arith.constant 1 : index
    %c3_32 = arith.constant 3 : index
    %46 = memref.load %arg1[%c1_31, %c3_32] : memref<2x4xi32, #tpu.memory_space<smem>>
    %c0_i32_33 = arith.constant 0 : i32
    %c7_i32_34 = arith.constant 7 : i32
    %47 = arith.maxsi %c0_i32_33, %46 : i32
    %48 = arith.minsi %c7_i32_34, %47 : i32
    %49 = arith.index_cast %48 : i32 to index
    %c0_35 = arith.constant 0 : index
    %50 = vector.load %arg2[%49, %c0_35] : memref<8x4xf32, #tpu.memory_space<vmem>>, vector<1x4xf32>
    %51 = arith.addf %45, %50 : vector<1x4xf32>
    %cst_36 = arith.constant 2.500000e-01 : f32
    %52 = vector.broadcast %cst_36 : f32 to vector<1x4xf32>
    %53 = arith.mulf %51, %52 : vector<1x4xf32>
    %cst_37 = arith.constant 0.000000e+00 : f32
    %54 = vector.broadcast %cst_37 : f32 to vector<1x4xf32>
    %cst_38 = arith.constant 0.000000e+00 : f32
    %55 = vector.broadcast %cst_38 : f32 to vector<1x4xf32>
    %cst_39 = arith.constant 0.000000e+00 : f32
    %56 = vector.broadcast %cst_39 : f32 to vector<1x4xf32>
    %cst_40 = arith.constant 0.000000e+00 : f32
    %57 = vector.broadcast %cst_40 : f32 to vector<1x4xf32>
    %cst_41 = arith.constant 0.000000e+00 : f32
    %58 = vector.broadcast %cst_41 : f32 to vector<1x4xf32>
    %cst_42 = arith.constant 0.000000e+00 : f32
    %59 = vector.broadcast %cst_42 : f32 to vector<1x4xf32>
    %60 = tpu.concatenate %26, %53, %54, %55, %56, %57, %58, %59 in 0 : vector<1x4xf32>, vector<1x4xf32>, vector<1x4xf32>, vector<1x4xf32>, vector<1x4xf32>, vector<1x4xf32>, vector<1x4xf32>, vector<1x4xf32> -> vector<8x4xf32>
    %c0_43 = arith.constant 0 : index
    %c0_44 = arith.constant 0 : index
    %61 = vector.load %arg3[%c0_43, %c0_44] : memref<8x4xf32, #tpu.memory_space<vmem>>, vector<8x4xf32>
    tpu.vector_store %arg3[%c0_43, %c0_44], %60 {strides = array<i32>} : memref<8x4xf32, #tpu.memory_space<vmem>>, vector<8x4xf32>,
    return
  }
  func.func @transform_0(%arg0: i32, %arg1: memref<2x4xi32, #tpu.memory_space<smem>>) -> (i32, i32) {
    %c0_i32 = arith.constant 0 : i32
    %c0_i32_0 = arith.constant 0 : i32
    %c0_i32_1 = arith.constant 0 : i32
    return %c0_i32, %c0_i32_0 : i32, i32
  }
  func.func @transform_1(%arg0: i32, %arg1: memref<2x4xi32, #tpu.memory_space<smem>>) -> (i32, i32) {
    %c0_i32 = arith.constant 0 : i32
    %c0_i32_0 = arith.constant 0 : i32
    %c0_i32_1 = arith.constant 0 : i32
    return %c0_i32, %c0_i32_0 : i32, i32
  }
}

</mosaic_0001>

<llo_original>
// kernel: tpu_custom_call.1
$region0: #{tpu_custom_call.1}
  #allocation0 [shape = 'u32[]', space=smem, size = 0x4, offset = 0x4, fixed_abs, tag = 'smem constant byte address 0x4 - core index']
  #allocation1 [shape = 'u32[144,128]{1,0:T(1,128)}', space=vmem, size = 0x12000, scoped, tag = 'internal scratch']
  #allocation2 [shape = 's32[1]{0}', space=sflag, size = 0x4, scoped, tag = 'scoped memory for tpu_custom_call.1']
  #allocation3 [shape = 'u8[1024]{0}', space=smem, size = 0x400, scoped, tag = 'prefetched SMEM operand 0']
  %s0 = inlined_call_operand.vmem [shape: s32[2,4], index: 0, kind: input, shape index: {}]
  %s1 = inlined_call_operand.vmem [shape: f32[8,4], index: 1, kind: input, shape index: {}]
  %s2 = inlined_call_operand.vmem [shape: f32[8,4], index: 2, kind: output, shape index: {}]
  %s3 = sld [smem:[#allocation0]]
  $region14: #{tpu_custom_call.1} parent=0
    _
  %s5 = ssub.s32 1, %s3
  %s6 = scalar_select 0, %s5, %s3
  %s7 = sshll.u32 %s0, 4
  %s8 = int_to_ptr.vmem [resolvable:$true] %s7
  %10 = dma.vmem_to_smem %s8, 32, [#allocation3], [#allocation2]
  %11 = dma.done [#allocation2], 32
  %12 = sfence
  // Predicated region
  $region2: #{tpu_custom_call.1} parent=0 // pred_check
    _
  $region3: #{tpu_custom_call.1} parent=0 // pred_check_branch
    %14 = sbr.rel (0) target = $region5
  $region4: #{tpu_custom_call.1} parent=0 // pred_region
    _
  $region5: #{tpu_custom_call.1} parent=0 // pred_fallthru
    _
  %s15 = sld [smem:[#allocation3]]
  %p16 = scmp.gt.s32.totalorder %s15, 0
  %s17 = scalar_select %p16, %s15, 0
  %p18 = scmp.lt.s32.totalorder %s17, 7
  %s19 = scalar_select %p18, %s17, 7
  %s20 = scalar_lea.vmem %s1, %s19
  %v21 = vld [vmem:[%s20] sm:$0x1]
  %v22 = vadd.f32 %v21, 0.0
  %s23 = sld [smem:[#allocation3 + $0x1]]
  %p24 = scmp.gt.s32.totalorder %s23, 0
  %s25 = scalar_select %p24, %s23, 0
  %p26 = scmp.lt.s32.totalorder %s25, 7
  %s27 = scalar_select %p26, %s25, 7
  %s28 = scalar_lea.vmem %s1, %s27
  %v29 = vld [vmem:[%s28] sm:$0x1]
  %v30 = vadd.f32 %v22, %v29
  %s31 = sld [smem:[#allocation3 + $0x2]]
  %p32 = scmp.gt.s32.totalorder %s31, 0
  %s33 = scalar_select %p32, %s31, 0
  %p34 = scmp.lt.s32.totalorder %s33, 7
  %s35 = scalar_select %p34, %s33, 7
  %s36 = scalar_lea.vmem %s1, %s35
  %v37 = vld [vmem:[%s36] sm:$0x1]
  %v38 = vadd.f32 %v30, %v37
  %s39 = sld [smem:[#allocation3 + $0x3]]
  %p40 = scmp.gt.s32.totalorder %s39, 0
  %s41 = scalar_select %p40, %s39, 0
  %p42 = scmp.lt.s32.totalorder %s41, 7
  %s43 = scalar_select %p42, %s41, 7
  %s44 = scalar_lea.vmem %s1, %s43
  %v45 = vld [vmem:[%s44] sm:$0x1]
  %v46 = vadd.f32 %v38, %v45
  %v47 = vmul.f32 %v46, 0.25
  %s48 = sld [smem:[#allocation3 + $0x80]]
  %p49 = scmp.gt.s32.totalorder %s48, 0
  %s50 = scalar_select %p49, %s48, 0
  %p51 = scmp.lt.s32.totalorder %s50, 7
  %s52 = scalar_select %p51, %s50, 7
  %s53 = scalar_lea.vmem %s1, %s52
  %v54 = vld [vmem:[%s53] sm:$0x1]
  %v55 = vadd.f32 %v54, 0.0
  %s56 = sld [smem:[#allocation3 + $0x81]]
  %p57 = scmp.gt.s32.totalorder %s56, 0
  %s58 = scalar_select %p57, %s56, 0
  %p59 = scmp.lt.s32.totalorder %s58, 7
  %s60 = scalar_select %p59, %s58, 7
  %s61 = scalar_lea.vmem %s1, %s60
  %v62 = vld [vmem:[%s61] sm:$0x1]
  %v63 = vadd.f32 %v55, %v62
  %s64 = sld [smem:[#allocation3 + $0x82]]
  %p65 = scmp.gt.s32.totalorder %s64, 0
  %s66 = scalar_select %p65, %s64, 0
  %p67 = scmp.lt.s32.totalorder %s66, 7
  %s68 = scalar_select %p67, %s66, 7
  %s69 = scalar_lea.vmem %s1, %s68
  %v70 = vld [vmem:[%s69] sm:$0x1]
  %v71 = vadd.f32 %v63, %v70
  %s72 = sld [smem:[#allocation3 + $0x83]]
  %p73 = scmp.gt.s32.totalorder %s72, 0
  %s74 = scalar_select %p73, %s72, 0
  %p75 = scmp.lt.s32.totalorder %s74, 7
  %s76 = scalar_select %p75, %s74, 7
  %s77 = scalar_lea.vmem %s1, %s76
  %v78 = vld [vmem:[%s77] sm:$0x1]
  %v79 = vadd.f32 %v71, %v78
  %v80 = vmul.f32 %v79, 0.25
  %v82 = vrot.slane %v80, 7
  %vm84 = vcmask 1040384
  %v85 = vsel %vm84, %v47, %v82
  %vm86 = vcmask 1041408
  %v87 = vsel %vm86, %v85, 0.0
  %vm88 = vcmask 1042432
  %v89 = vsel %vm88, %v87, 0.0
  %vm90 = vcmask 1043456
  %v91 = vsel %vm90, %v89, 0.0
  %vm92 = vcmask 1044480
  %v93 = vsel %vm92, %v91, 0.0
  %vm94 = vcmask 1045504
  %v95 = vsel %vm94, %v93, 0.0
  %vm96 = vcmask 1046528
  %v97 = vsel %vm96, %v95, 0.0
  %vm98 = vcmask 31744
  %99 = vst.msk [vmem:[%s2] sm:$0xff] %vm98, %v97
  // Predicated region
  $region6: #{tpu_custom_call.1} parent=0 // pred_check
    _
  $region7: #{tpu_custom_call.1} parent=0 // pred_check_branch
    %101 = sbr.rel (0) target = $region9
  $region8: #{tpu_custom_call.1} parent=0 // pred_region
    _
  $region9: #{tpu_custom_call.1} parent=0 // pred_fallthru
    _
  // Predicated region
  $region10: #{tpu_custom_call.1} parent=0 // pred_check
    _
  $region11: #{tpu_custom_call.1} parent=0 // pred_check_branch
    %103 = sbr.rel (0) target = $region13
  $region12: #{tpu_custom_call.1} parent=0 // pred_region
    _
  $region13: #{tpu_custom_call.1} parent=0 // pred_fallthru
    _

</llo_original>
